<compile_context>
chip_gen: v7x
topology: tpu7x:2x2x1
jax: 0.10.0
libtpu: 0.0.40
codegen_flags: <defaults>
</compile_context>

<pallas_src>
import functools

import jax
import jax.numpy as jnp
from jax.experimental import pallas as pl
from jax.experimental.pallas import tpu as pltpu


# ----------------------------------------------------------------------------
# Pallas kernel: fused  x -> ReLU(x@W0+b0) -> ReLU(.@W1+b1) -> .@W2+b2
# ----------------------------------------------------------------------------
def _mlp3_kernel(x_ref, w0_ref, b0_ref, w1_ref, b1_ref, w2_ref, b2_ref, o_ref):
    # Cast the activation tile to the MXU operand dtype IN-KERNEL (avoids a
    # separate wrapper cast pass over HBM).
    x = x_ref[...].astype(w0_ref.dtype)                       # (tile, d_in)
    h0 = jnp.dot(x, w0_ref[...], preferred_element_type=jnp.float32) + b0_ref[...]
    h0 = jnp.maximum(h0, 0.0)                                  # node_enc ReLU (f32)
    h0 = h0.astype(w1_ref.dtype)
    h1 = jnp.dot(h0, w1_ref[...], preferred_element_type=jnp.float32) + b1_ref[...]
    h1 = jnp.maximum(h1, 0.0)                                  # node_dec hidden ReLU (f32)
    h1 = h1.astype(w2_ref.dtype)
    o = jnp.dot(h1, w2_ref[...], preferred_element_type=jnp.float32) + b2_ref[...]
    o_ref[...] = o.astype(o_ref.dtype)                         # compact (tile, d_out) store


# ----------------------------------------------------------------------------
# Tiling helpers
# ----------------------------------------------------------------------------
def _round_up(x, m):
    return ((x + m - 1) // m) * m


def _cdiv(a, b):
    return -(-a // b)


def _choose_row_tiling(rows, *, row_align=8, max_tile=8192, num_tensorcores=1):
    """Row tile + padded row count.

    Single-TC chips (v5e/v6e): one largest tile (<= max_tile) -> fewest grid
    steps.  Dual-TC chips (v7x): an EVEN number of equal tiles so both
    TensorCores get balanced work, with minimal row padding.
    """
    rows_aligned = _round_up(max(rows, row_align), row_align)
    if num_tensorcores > 1:
        k = _cdiv(rows_aligned, num_tensorcores * max_tile)      # k >= 1
        tile = _round_up(_cdiv(rows_aligned, num_tensorcores * k), row_align)
        rows_padded = num_tensorcores * k * tile                 # even, balanced grid
    else:
        tile = min(max_tile, rows_aligned)
        rows_padded = _round_up(rows_aligned, tile)
    return tile, rows_padded


def _num_tensorcores_per_chip():
    try:
        kind = jax.devices()[0].device_kind.lower()
    except Exception:
        return 1
    return 2 if ("v7" in kind or "7x" in kind) else 1


# ----------------------------------------------------------------------------
# Wrapper: one pallas_call over ALL rows (all timesteps stacked)
# ----------------------------------------------------------------------------
@functools.partial(
    jax.jit, static_argnames=("compute_dtype", "max_tile_rows", "num_tensorcores"))
def fused_node_mlp(x, w0, b0, w1, b1, w2, b2, *, compute_dtype=jnp.bfloat16,
                   max_tile_rows=8192, num_tensorcores=1):
    """x: (R, D_in) f32 -> (R, D_out) f32 via a single fused 3-layer-MLP kernel."""
    rows, d_in = x.shape
    d_h = w0.shape[1]
    d_out = w2.shape[1]

    # Weights are tiny: cast once here; biases stay f32 (added to f32 accum).
    w0c = w0.astype(compute_dtype)
    w1c = w1.astype(compute_dtype)
    w2c = w2.astype(compute_dtype)

    tile_n, rows_p = _choose_row_tiling(
        rows, max_tile=max_tile_rows, num_tensorcores=num_tensorcores)
    xp = x if rows_p == rows else jnp.pad(x, ((0, rows_p - rows), (0, 0)))

    grid = (rows_p // tile_n,)
    full = lambda i: (0, 0)  # weights/biases: same (single) block every step

    flops = 2 * rows_p * (d_in * d_h + d_h * d_h + d_h * d_out)
    bytes_accessed = (
        rows_p * d_in * xp.dtype.itemsize            # activation read
        + rows_p * d_out * 4                         # compact f32 output write
        + (d_in * d_h + d_h + d_h * d_h + d_h + d_h * d_out + d_out) * 2)  # weights (bf16)

    out = pl.pallas_call(
        _mlp3_kernel,
        out_shape=jax.ShapeDtypeStruct((rows_p, d_out), jnp.float32),
        grid_spec=pl.GridSpec(
            grid=grid,
            in_specs=[
                pl.BlockSpec((tile_n, d_in), lambda i: (i, 0)),   # node-row tile
                pl.BlockSpec((d_in, d_h), full),                  # W0 (resident)
                pl.BlockSpec((1, d_h), full),                     # b0
                pl.BlockSpec((d_h, d_h), full),                   # W1
                pl.BlockSpec((1, d_h), full),                     # b1
                pl.BlockSpec((d_h, d_out), full),                 # W2
                pl.BlockSpec((1, d_out), full),                   # b2
            ],
            out_specs=pl.BlockSpec((tile_n, d_out), lambda i: (i, 0)),
        ),
        compiler_params=pltpu.CompilerParams(
            dimension_semantics=("parallel",),
            vmem_limit_bytes=48 * 1024 * 1024,
        ),
        cost_estimate=pl.CostEstimate(
            flops=flops, transcendentals=0, bytes_accessed=bytes_accessed),
    )(xp, w0c, b0, w1c, b1, w2c, b2)

    return out if rows_p == rows else out[:rows]


# ----------------------------------------------------------------------------
# Parameter init (deterministic, PyTorch-Linear-style uniform(-1/sqrt(fan_in)))
# ----------------------------------------------------------------------------
def init_linear(key, fan_in, fan_out):
    kw, kb = jax.random.split(key)
    bound = 1.0 / jnp.sqrt(float(fan_in))
    w = jax.random.uniform(kw, (fan_in, fan_out), jnp.float32, -bound, bound)
    b = jax.random.uniform(kb, (1, fan_out), jnp.float32, -bound, bound)
    return w, b


class Ablation3Pallas:
    """Parameters + forward mirroring the returned value of ablation_3.forward."""

    def __init__(self, node_attr_size, node_hidden_size, out_size, key,
                 compute_dtype=jnp.bfloat16):
        k0, k1, k2 = jax.random.split(key, 3)
        # node_enc: Linear(node_attr_size, node_h_dim) + ReLU
        self.w_enc, self.b_enc = init_linear(k0, node_attr_size, node_hidden_size)
        # node_dec: Linear(node_h_dim, node_h_dim) + ReLU + Linear(node_h_dim, out_size)
        self.w_dec1, self.b_dec1 = init_linear(k1, node_hidden_size, node_hidden_size)
        self.w_dec2, self.b_dec2 = init_linear(k2, node_hidden_size, out_size)
        self.out_size = out_size
        self.compute_dtype = compute_dtype
        self.num_tensorcores = _num_tensorcores_per_chip()

    def forward(self, data, num_processing_steps):
        # Preferred input: pre-stacked (T, N, D_in) array -> no concatenate pass.
        if isinstance(data, (list, tuple)):
            data = jnp.stack([data[t] for t in range(num_processing_steps)], axis=0)
        T = num_processing_steps
        n_per_step, d_in = data.shape[1], data.shape[2]
        x_all = data.reshape(T * n_per_step, d_in)
        out_all = fused_node_mlp(
            x_all,
            self.w_enc, self.b_enc,
            self.w_dec1, self.b_dec1,
            self.w_dec2, self.b_dec2,
            compute_dtype=self.compute_dtype,
            num_tensorcores=self.num_tensorcores,
        )
        out_all = out_all.reshape(T, n_per_step, self.out_size)
        output_nodes = [out_all[t] for t in range(T)]   # list to match the reference API
        return output_nodes, 0.0, 0.0, 0.0


# ----------------------------------------------------------------------------
# Pure-JAX reference (mirrors the kernel's bf16-operand / f32-accumulate path)
# ----------------------------------------------------------------------------
def ref_forward(x, m):
    cd = m.compute_dtype
    h0 = jnp.maximum(
        jnp.dot(x.astype(cd), m.w_enc.astype(cd),
                preferred_element_type=jnp.float32) + m.b_enc, 0.0)
    h1 = jnp.maximum(
        jnp.dot(h0.astype(cd), m.w_dec1.astype(cd),
                preferred_element_type=jnp.float32) + m.b_dec1, 0.0)
    return jnp.dot(h1.astype(cd), m.w_dec2.astype(cd),
                   preferred_element_type=jnp.float32) + m.b_dec2


if __name__ == "__main__":
    # Small shapes consistent with the module's constructor arguments.
    node_attr_size = 8       # node_attr_size / input_size
    node_hidden_size = 32    # node_hidden_size
    out_size = 4             # out_size
    n_nodes = 64             # number of graph nodes per step
    num_processing_steps = 3

    key = jax.random.PRNGKey(0)
    k_param, k_data = jax.random.split(key)

    model = Ablation3Pallas(node_attr_size, node_hidden_size, out_size, k_param)

    # Pre-stacked node attributes: (T, N, D_in)
    data = jax.random.normal(
        k_data, (num_processing_steps, n_nodes, node_attr_size), jnp.float32)

    output_nodes, rl, il, aux = model.forward(data, num_processing_steps)
    output_nodes = [jax.block_until_ready(o) for o in output_nodes]

    # Correctness check against a pure-JAX reference using the same
    # bf16-operand / f32-accumulate numerics as the kernel.
    # (Exact-f32 parity with the PyTorch model would require compute_dtype=f32.)
    for t in range(num_processing_steps):
        ref = ref_forward(data[t], model)
        assert output_nodes[t].shape == (n_nodes, out_size)
        assert jnp.allclose(output_nodes[t], ref, atol=1e-3, rtol=1e-3), (
            f"mismatch at step {t}: max abs err "
            f"{jnp.max(jnp.abs(output_nodes[t] - ref))}")

    print("KERNEL_OK")
</pallas_src>

<mosaic_0001>
module attributes {stable_mosaic.version = 11 : i64} {
  func.func @_mlp3_kernel(%arg0: i32, %arg1: memref<192x8xf32, #tpu.memory_space<vmem>>, %arg2: memref<8x32xbf16, #tpu.memory_space<vmem>>, %arg3: memref<1x32xf32, #tpu.memory_space<vmem>>, %arg4: memref<32x32xbf16, #tpu.memory_space<vmem>>, %arg5: memref<1x32xf32, #tpu.memory_space<vmem>>, %arg6: memref<32x4xbf16, #tpu.memory_space<vmem>>, %arg7: memref<1x4xf32, #tpu.memory_space<vmem>>, %arg8: memref<192x4xf32, #tpu.memory_space<vmem>>) attributes {dimension_semantics = [#tpu.dimension_semantics<parallel>], iteration_bounds = array<i64: 1>, scalar_prefetch = 0 : i64, scratch_operands = 0 : i64, tpu.core_type = #tpu.core_type<tc>, window_params = [{transform_indices = @transform_0, window_bounds = array<i64: 192, 8>}, {pipeline_mode = #tpu.pipeline_mode<synchronous>, transform_indices = @transform_1, window_bounds = array<i64: 8, 32>}, {pipeline_mode = #tpu.pipeline_mode<synchronous>, transform_indices = @transform_2, window_bounds = array<i64: 1, 32>}, {pipeline_mode = #tpu.pipeline_mode<synchronous>, transform_indices = @transform_3, window_bounds = array<i64: 32, 32>}, {pipeline_mode = #tpu.pipeline_mode<synchronous>, transform_indices = @transform_4, window_bounds = array<i64: 1, 32>}, {pipeline_mode = #tpu.pipeline_mode<synchronous>, transform_indices = @transform_5, window_bounds = array<i64: 32, 4>}, {pipeline_mode = #tpu.pipeline_mode<synchronous>, transform_indices = @transform_6, window_bounds = array<i64: 1, 4>}, {transform_indices = @transform_7, window_bounds = array<i64: 192, 4>}]} {
    %c0 = arith.constant 0 : index
    %c0_0 = arith.constant 0 : index
    %0 = vector.load %arg1[%c0, %c0_0] : memref<192x8xf32, #tpu.memory_space<vmem>>, vector<192x8xf32>
    %1 = arith.truncf %0 : vector<192x8xf32> to vector<192x8xbf16>
    %c0_1 = arith.constant 0 : index
    %c0_2 = arith.constant 0 : index
    %2 = vector.load %arg2[%c0_1, %c0_2] : memref<8x32xbf16, #tpu.memory_space<vmem>>, vector<8x32xbf16>
    %cst = arith.constant dense<0.000000e+00> : vector<192x32xf32>
    %3 = tpu.matmul %1, %2, %cst {dimension_numbers = #tpu.dot_dimension_numbers<[1], [0], [0], [1], [0, 0, 1, 1], [], []>} : vector<192x8xbf16>, vector<8x32xbf16>, vector<192x32xf32> -> vector<192x32xf32>
    %c0_3 = arith.constant 0 : index
    %c0_4 = arith.constant 0 : index
    %4 = vector.load %arg3[%c0_3, %c0_4] : memref<1x32xf32, #tpu.memory_space<vmem>>, vector<1x32xf32>
    %5 = vector.broadcast %4 : vector<1x32xf32> to vector<192x32xf32>
    %6 = arith.addf %3, %5 : vector<192x32xf32>
    %cst_5 = arith.constant 0.000000e+00 : f32
    %7 = vector.broadcast %cst_5 : f32 to vector<192x32xf32>
    %8 = arith.maximumf %6, %7 : vector<192x32xf32>
    %9 = arith.truncf %8 : vector<192x32xf32> to vector<192x32xbf16>
    %c0_6 = arith.constant 0 : index
    %c0_7 = arith.constant 0 : index
    %10 = vector.load %arg4[%c0_6, %c0_7] : memref<32x32xbf16, #tpu.memory_space<vmem>>, vector<32x32xbf16>
    %cst_8 = arith.constant dense<0.000000e+00> : vector<192x32xf32>
    %11 = tpu.matmul %9, %10, %cst_8 {dimension_numbers = #tpu.dot_dimension_numbers<[1], [0], [0], [1], [0, 0, 1, 1], [], []>} : vector<192x32xbf16>, vector<32x32xbf16>, vector<192x32xf32> -> vector<192x32xf32>
    %c0_9 = arith.constant 0 : index
    %c0_10 = arith.constant 0 : index
    %12 = vector.load %arg5[%c0_9, %c0_10] : memref<1x32xf32, #tpu.memory_space<vmem>>, vector<1x32xf32>
    %13 = vector.broadcast %12 : vector<1x32xf32> to vector<192x32xf32>
    %14 = arith.addf %11, %13 : vector<192x32xf32>
    %cst_11 = arith.constant 0.000000e+00 : f32
    %15 = vector.broadcast %cst_11 : f32 to vector<192x32xf32>
    %16 = arith.maximumf %14, %15 : vector<192x32xf32>
    %17 = arith.truncf %16 : vector<192x32xf32> to vector<192x32xbf16>
    %c0_12 = arith.constant 0 : index
    %c0_13 = arith.constant 0 : index
    %18 = vector.load %arg6[%c0_12, %c0_13] : memref<32x4xbf16, #tpu.memory_space<vmem>>, vector<32x4xbf16>
    %cst_14 = arith.constant dense<0.000000e+00> : vector<192x4xf32>
    %19 = tpu.matmul %17, %18, %cst_14 {dimension_numbers = #tpu.dot_dimension_numbers<[1], [0], [0], [1], [0, 0, 1, 1], [], []>} : vector<192x32xbf16>, vector<32x4xbf16>, vector<192x4xf32> -> vector<192x4xf32>
    %c0_15 = arith.constant 0 : index
    %c0_16 = arith.constant 0 : index
    %20 = vector.load %arg7[%c0_15, %c0_16] : memref<1x4xf32, #tpu.memory_space<vmem>>, vector<1x4xf32>
    %21 = vector.broadcast %20 : vector<1x4xf32> to vector<192x4xf32>
    %22 = arith.addf %19, %21 : vector<192x4xf32>
    %c0_17 = arith.constant 0 : index
    %c0_18 = arith.constant 0 : index
    %23 = vector.load %arg8[%c0_17, %c0_18] : memref<192x4xf32, #tpu.memory_space<vmem>>, vector<192x4xf32>
    tpu.vector_store %arg8[%c0_17, %c0_18], %22 {strides = array<i32>} : memref<192x4xf32, #tpu.memory_space<vmem>>, vector<192x4xf32>,
    return
  }
  func.func @transform_0(%arg0: i32) -> (i32, i32) {
    %c0_i32 = arith.constant 0 : i32
    %c0_i32_0 = arith.constant 0 : i32
    return %arg0, %c0_i32 : i32, i32
  }
  func.func @transform_1(%arg0: i32) -> (i32, i32) {
    %c0_i32 = arith.constant 0 : i32
    %c0_i32_0 = arith.constant 0 : i32
    %c0_i32_1 = arith.constant 0 : i32
    return %c0_i32, %c0_i32_0 : i32, i32
  }
  func.func @transform_2(%arg0: i32) -> (i32, i32) {
    %c0_i32 = arith.constant 0 : i32
    %c0_i32_0 = arith.constant 0 : i32
    %c0_i32_1 = arith.constant 0 : i32
    return %c0_i32, %c0_i32_0 : i32, i32
  }
  func.func @transform_3(%arg0: i32) -> (i32, i32) {
    %c0_i32 = arith.constant 0 : i32
    %c0_i32_0 = arith.constant 0 : i32
    %c0_i32_1 = arith.constant 0 : i32
    return %c0_i32, %c0_i32_0 : i32, i32
  }
  func.func @transform_4(%arg0: i32) -> (i32, i32) {
    %c0_i32 = arith.constant 0 : i32
    %c0_i32_0 = arith.constant 0 : i32
    %c0_i32_1 = arith.constant 0 : i32
    return %c0_i32, %c0_i32_0 : i32, i32
  }
  func.func @transform_5(%arg0: i32) -> (i32, i32) {
    %c0_i32 = arith.constant 0 : i32
    %c0_i32_0 = arith.constant 0 : i32
    %c0_i32_1 = arith.constant 0 : i32
    return %c0_i32, %c0_i32_0 : i32, i32
  }
  func.func @transform_6(%arg0: i32) -> (i32, i32) {
    %c0_i32 = arith.constant 0 : i32
    %c0_i32_0 = arith.constant 0 : i32
    %c0_i32_1 = arith.constant 0 : i32
    return %c0_i32, %c0_i32_0 : i32, i32
  }
  func.func @transform_7(%arg0: i32) -> (i32, i32) {
    %c0_i32 = arith.constant 0 : i32
    %c0_i32_0 = arith.constant 0 : i32
    return %arg0, %c0_i32 : i32, i32
  }
}

</mosaic_0001>

<llo_original>
// kernel: fused_node_mlp.1
$region0: #{fused_node_mlp.1}
  #allocation0 [shape = 'u32[]', space=smem, size = 0x4, offset = 0x4, fixed_abs, tag = 'smem constant byte address 0x4 - core index']
  #allocation1 [shape = 'u32[144,128]{1,0:T(1,128)}', space=vmem, size = 0x12000, scoped, tag = 'internal scratch']
  %s0 = inlined_call_operand.vmem [shape: f32[192,8], index: 0, kind: input, shape index: {}]
  %s1 = inlined_call_operand.vmem [shape: bf16[8,32], index: 1, kind: input, shape index: {}]
  %s2 = inlined_call_operand.vmem [shape: f32[1,32], index: 2, kind: input, shape index: {}]
  %s3 = inlined_call_operand.vmem [shape: bf16[32,32], index: 3, kind: input, shape index: {}]
  %s4 = inlined_call_operand.vmem [shape: f32[1,32], index: 4, kind: input, shape index: {}]
  %s5 = inlined_call_operand.vmem [shape: bf16[32,4], index: 5, kind: input, shape index: {}]
  %s6 = inlined_call_operand.vmem [shape: f32[1,4], index: 6, kind: input, shape index: {}]
  %s7 = inlined_call_operand.vmem [shape: f32[192,4], index: 7, kind: output, shape index: {}]
  %s8 = sld [smem:[#allocation0]]
  $region38: #{fused_node_mlp.1} parent=0
    _
  %s10 = ssub.s32 1, %s8
  %s11 = scalar_select 0, %s10, %s8
  // Predicated region
  $region2: #{fused_node_mlp.1} parent=0 // pred_check
    _
  $region3: #{fused_node_mlp.1} parent=0 // pred_check_branch
    %13 = sbr.rel (0) target = $region5
  $region4: #{fused_node_mlp.1} parent=0 // pred_region
    _
  $region5: #{fused_node_mlp.1} parent=0 // pred_fallthru
    _
  // Predicated region
  $region6: #{fused_node_mlp.1} parent=0 // pred_check
    _
  $region7: #{fused_node_mlp.1} parent=0 // pred_check_branch
    %15 = sbr.rel (0) target = $region9
  $region8: #{fused_node_mlp.1} parent=0 // pred_region
    _
  $region9: #{fused_node_mlp.1} parent=0 // pred_fallthru
    _
  // Predicated region
  $region10: #{fused_node_mlp.1} parent=0 // pred_check
    _
  $region11: #{fused_node_mlp.1} parent=0 // pred_check_branch
    %17 = sbr.rel (0) target = $region13
  $region12: #{fused_node_mlp.1} parent=0 // pred_region
    _
  $region13: #{fused_node_mlp.1} parent=0 // pred_fallthru
    _
  // Predicated region
  $region14: #{fused_node_mlp.1} parent=0 // pred_check
    _
  $region15: #{fused_node_mlp.1} parent=0 // pred_check_branch
    %19 = sbr.rel (0) target = $region17
  $region16: #{fused_node_mlp.1} parent=0 // pred_region
    _
  $region17: #{fused_node_mlp.1} parent=0 // pred_fallthru
    _
  // Predicated region
  $region18: #{fused_node_mlp.1} parent=0 // pred_check
    _
  $region19: #{fused_node_mlp.1} parent=0 // pred_check_branch
    %21 = sbr.rel (0) target = $region21
  $region20: #{fused_node_mlp.1} parent=0 // pred_region
    _
  $region21: #{fused_node_mlp.1} parent=0 // pred_fallthru
    _
  // Predicated region
  $region22: #{fused_node_mlp.1} parent=0 // pred_check
    _
  $region23: #{fused_node_mlp.1} parent=0 // pred_check_branch
    %23 = sbr.rel (0) target = $region25
  $region24: #{fused_node_mlp.1} parent=0 // pred_region
    _
  $region25: #{fused_node_mlp.1} parent=0 // pred_fallthru
    _
  // Predicated region
  $region26: #{fused_node_mlp.1} parent=0 // pred_check
    _
  $region27: #{fused_node_mlp.1} parent=0 // pred_check_branch
    %25 = sbr.rel (0) target = $region29
  $region28: #{fused_node_mlp.1} parent=0 // pred_region
    _
  $region29: #{fused_node_mlp.1} parent=0 // pred_fallthru
    _
  %v27 = vld [vmem:[%s0] sm:$0xff]
  %v28 = vld [vmem:[%s0 + $0x8] sm:$0xff]
  %v29 = vld [vmem:[%s0 + $0x10] sm:$0xff]
  %v30 = vld [vmem:[%s0 + $0x18] sm:$0xff]
  %v31 = vld [vmem:[%s0 + $0x20] sm:$0xff]
  %v32 = vld [vmem:[%s0 + $0x28] sm:$0xff]
  %v33 = vld [vmem:[%s0 + $0x30] sm:$0xff]
  %v34 = vld [vmem:[%s0 + $0x38] sm:$0xff]
  %v35 = vld [vmem:[%s0 + $0x40] sm:$0xff]
  %v36 = vld [vmem:[%s0 + $0x48] sm:$0xff]
  %v37 = vld [vmem:[%s0 + $0x50] sm:$0xff]
  %v38 = vld [vmem:[%s0 + $0x58] sm:$0xff]
  %v39 = vld [vmem:[%s0 + $0x60] sm:$0xff]
  %v40 = vld [vmem:[%s0 + $0x68] sm:$0xff]
  %v41 = vld [vmem:[%s0 + $0x70] sm:$0xff]
  %v42 = vld [vmem:[%s0 + $0x78] sm:$0xff]
  %v43 = vld [vmem:[%s0 + $0x80] sm:$0xff]
  %v44 = vld [vmem:[%s0 + $0x88] sm:$0xff]
  %v45 = vld [vmem:[%s0 + $0x90] sm:$0xff]
  %v46 = vld [vmem:[%s0 + $0x98] sm:$0xff]
  %v47 = vld [vmem:[%s0 + $0xa0] sm:$0xff]
  %v48 = vld [vmem:[%s0 + $0xa8] sm:$0xff]
  %v49 = vld [vmem:[%s0 + $0xb0] sm:$0xff]
  %v50 = vld [vmem:[%s0 + $0xb8] sm:$0xff]
  %v51 = vpack.c.bf16 %v28, %v27
  %v52 = vpack.c.bf16 %v30, %v29
  %v53 = vpack.c.bf16 %v32, %v31
  %v54 = vpack.c.bf16 %v34, %v33
  %v55 = vpack.c.bf16 %v36, %v35
  %v56 = vpack.c.bf16 %v38, %v37
  %v57 = vpack.c.bf16 %v40, %v39
  %v58 = vpack.c.bf16 %v42, %v41
  %v59 = vpack.c.bf16 %v44, %v43
  %v60 = vpack.c.bf16 %v46, %v45
  %v61 = vpack.c.bf16 %v48, %v47
  %v62 = vpack.c.bf16 %v50, %v49
  %v63 = vld [vmem:[%s1] sm:$0xf]
  %v64 = vld [vmem:[%s2] sm:$0x1]
  %v66 = vlaneseq
  %v67 = vshrl.u32 %v66, 7
  %v68 = vsub.s32 0, %v67
  %v69 = vrot.slane %v64, %v68
  %vm71 = vcmask 64512
  %v73 = vsel %vm71, %v51, 0
  %v76 = vsel %vm71, %v52, 0
  %v79 = vsel %vm71, %v53, 0
  %v82 = vsel %vm71, %v54, 0
  %v85 = vsel %vm71, %v55, 0
  %v88 = vsel %vm71, %v56, 0
  %v91 = vsel %vm71, %v57, 0
  %v94 = vsel %vm71, %v58, 0
  %v97 = vsel %vm71, %v59, 0
  %v100 = vsel %vm71, %v60, 0
  %v103 = vsel %vm71, %v61, 0
  %v106 = vsel %vm71, %v62, 0
  %vm108 = vcmask 1043456
  %v110 = vsel %vm108, %v63, 0
  %112 = vmatprep.subr.bf16.mxu0 0
  %113 = vmatpush1.bf16.msra.mxu0 %v110
  %114 = vmatprep.subr.bf16.mxu0 0
  %115 = vmatpush1.bf16.msra.mxu0 0
  %116 = vmatprep.subr.bf16.mxu0 0
  %117 = vmatpush1.bf16.msra.mxu0 0
  %118 = vmatprep.subr.bf16.mxu0 0
  %119 = vmatpush1.bf16.msra.mxu0 0
  %120 = vmatprep.subr.bf16.mxu0 0
  %121 = vmatpush1.bf16.msra.mxu0 0
  %122 = vmatprep.subr.bf16.mxu0 0
  %123 = vmatpush1.bf16.msra.mxu0 0
  %124 = vmatprep.subr.bf16.mxu0 0
  %125 = vmatpush1.bf16.msra.mxu0 0
  %126 = vmatprep.subr.bf16.mxu0 0
  %127 = vmatpush1.bf16.msra.mxu0 0
  %128 = vmatprep.subr.bf16.mxu0 0
  %129 = vmatpush1.bf16.msra.mxu0 0
  %130 = vmatprep.subr.bf16.mxu0 0
  %131 = vmatpush1.bf16.msra.mxu0 0
  %132 = vmatprep.subr.bf16.mxu0 0
  %133 = vmatpush1.bf16.msra.mxu0 0
  %134 = vmatprep.subr.bf16.mxu0 0
  %135 = vmatpush1.bf16.msra.mxu0 0
  %136 = vmatprep.subr.bf16.mxu0 0
  %137 = vmatpush1.bf16.msra.mxu0 0
  %138 = vmatprep.subr.bf16.mxu0 0
  %139 = vmatpush1.bf16.msra.mxu0 0
  %140 = vmatprep.subr.bf16.mxu0 0
  %141 = vmatpush1.bf16.msra.mxu0 0
  %142 = vmatprep.subr.bf16.mxu0 0
  %143 = vmatpush1.bf16.msra.mxu0 0
  %144 = vmatprep.mubr.bf16.mxu0 0
  %145 = vmatmul.mubr.bf16.gmra.mrb[0].mxu0 %v73
  %v146 = vpop.f32.mrb[0].mxu0
  %v147 = vadd.f32 %v69, %v146
  %v148 = vpop.f32.mrb[0].mxu0
  %v149 = vpop.f32.mrb[0].mxu0
  %v150 = vadd.f32 %v69, %v149
  %v151 = vpop.f32.mrb[0].mxu0
  %152 = vmatprep.mubr.bf16.mxu0 0
  %153 = vmatmul.mubr.bf16.gmra.mrb[0].mxu0 %v76
  %v154 = vpop.f32.mrb[0].mxu0
  %v155 = vadd.f32 %v69, %v154
  %v156 = vpop.f32.mrb[0].mxu0
  %v157 = vpop.f32.mrb[0].mxu0
  %v158 = vadd.f32 %v69, %v157
  %v159 = vpop.f32.mrb[0].mxu0
  %160 = vmatprep.mubr.bf16.mxu0 0
  %161 = vmatmul.mubr.bf16.gmra.mrb[0].mxu0 %v79
  %v162 = vpop.f32.mrb[0].mxu0
  %v163 = vadd.f32 %v69, %v162
  %v164 = vpop.f32.mrb[0].mxu0
  %v165 = vpop.f32.mrb[0].mxu0
  %v166 = vadd.f32 %v69, %v165
  %v167 = vpop.f32.mrb[0].mxu0
  %168 = vmatprep.mubr.bf16.mxu0 0
  %169 = vmatmul.mubr.bf16.gmra.mrb[0].mxu0 %v82
  %v170 = vpop.f32.mrb[0].mxu0
  %v171 = vadd.f32 %v69, %v170
  %v172 = vpop.f32.mrb[0].mxu0
  %v173 = vpop.f32.mrb[0].mxu0
  %v174 = vadd.f32 %v69, %v173
  %v175 = vpop.f32.mrb[0].mxu0
  %176 = vmatprep.mubr.bf16.mxu0 0
  %177 = vmatmul.mubr.bf16.gmra.mrb[0].mxu0 %v85
  %v178 = vpop.f32.mrb[0].mxu0
  %v179 = vadd.f32 %v69, %v178
  %v180 = vpop.f32.mrb[0].mxu0
  %v181 = vpop.f32.mrb[0].mxu0
  %v182 = vadd.f32 %v69, %v181
  %v183 = vpop.f32.mrb[0].mxu0
  %184 = vmatprep.mubr.bf16.mxu0 0
  %185 = vmatmul.mubr.bf16.gmra.mrb[0].mxu0 %v88
  %v186 = vpop.f32.mrb[0].mxu0
  %v187 = vadd.f32 %v69, %v186
  %v188 = vpop.f32.mrb[0].mxu0
  %v189 = vpop.f32.mrb[0].mxu0
  %v190 = vadd.f32 %v69, %v189
  %v191 = vpop.f32.mrb[0].mxu0
  %192 = vmatprep.mubr.bf16.mxu0 0
  %193 = vmatmul.mubr.bf16.gmra.mrb[0].mxu0 %v91
  %v194 = vpop.f32.mrb[0].mxu0
  %v195 = vadd.f32 %v69, %v194
  %v196 = vpop.f32.mrb[0].mxu0
  %v197 = vpop.f32.mrb[0].mxu0
  %v198 = vadd.f32 %v69, %v197
  %v199 = vpop.f32.mrb[0].mxu0
  %200 = vmatprep.mubr.bf16.mxu0 0
  %201 = vmatmul.mubr.bf16.gmra.mrb[0].mxu0 %v94
  %v202 = vpop.f32.mrb[0].mxu0
  %v203 = vadd.f32 %v69, %v202
  %v204 = vpop.f32.mrb[0].mxu0
  %v205 = vpop.f32.mrb[0].mxu0
  %v206 = vadd.f32 %v69, %v205
  %v207 = vpop.f32.mrb[0].mxu0
  %208 = vmatprep.mubr.bf16.mxu0 0
  %209 = vmatmul.mubr.bf16.gmra.mrb[0].mxu0 %v97
  %v210 = vpop.f32.mrb[0].mxu0
  %v211 = vadd.f32 %v69, %v210
  %v212 = vpop.f32.mrb[0].mxu0
  %v213 = vpop.f32.mrb[0].mxu0
  %v214 = vadd.f32 %v69, %v213
  %v215 = vpop.f32.mrb[0].mxu0
  %216 = vmatprep.mubr.bf16.mxu0 0
  %217 = vmatmul.mubr.bf16.gmra.mrb[0].mxu0 %v100
  %v218 = vpop.f32.mrb[0].mxu0
  %v219 = vadd.f32 %v69, %v218
  %v220 = vpop.f32.mrb[0].mxu0
  %v221 = vpop.f32.mrb[0].mxu0
  %v222 = vadd.f32 %v69, %v221
  %v223 = vpop.f32.mrb[0].mxu0
  %224 = vmatprep.mubr.bf16.mxu0 0
  %225 = vmatmul.mubr.bf16.gmra.mrb[0].mxu0 %v103
  %v226 = vpop.f32.mrb[0].mxu0
  %v227 = vadd.f32 %v69, %v226
  %v228 = vpop.f32.mrb[0].mxu0
  %v229 = vpop.f32.mrb[0].mxu0
  %v230 = vadd.f32 %v69, %v229
  %v231 = vpop.f32.mrb[0].mxu0
  %232 = vmatprep.mubr.bf16.mxu0 0
  %233 = vmatmul.mubr.bf16.gmra.mrb[0].mxu0 %v106
  %v234 = vpop.f32.mrb[0].mxu0
  %v235 = vadd.f32 %v69, %v234
  %v236 = vpop.f32.mrb[0].mxu0
  %v237 = vpop.f32.mrb[0].mxu0
  %v238 = vadd.f32 %v69, %v237
  %v239 = vpop.f32.mrb[0].mxu0
  %240 = vdwg.mxu0
  %v241 = vmax.f32 %v147, 0.0
  %v242 = vmax.f32 %v150, 0.0
  %v243 = vmax.f32 %v155, 0.0
  %v244 = vmax.f32 %v158, 0.0
  %v245 = vmax.f32 %v163, 0.0
  %v246 = vmax.f32 %v166, 0.0
  %v247 = vmax.f32 %v171, 0.0
  %v248 = vmax.f32 %v174, 0.0
  %v249 = vmax.f32 %v179, 0.0
  %v250 = vmax.f32 %v182, 0.0
  %v251 = vmax.f32 %v187, 0.0
  %v252 = vmax.f32 %v190, 0.0
  %v253 = vmax.f32 %v195, 0.0
  %v254 = vmax.f32 %v198, 0.0
  %v255 = vmax.f32 %v203, 0.0
  %v256 = vmax.f32 %v206, 0.0
  %v257 = vmax.f32 %v211, 0.0
  %v258 = vmax.f32 %v214, 0.0
  %v259 = vmax.f32 %v219, 0.0
  %v260 = vmax.f32 %v222, 0.0
  %v261 = vmax.f32 %v227, 0.0
  %v262 = vmax.f32 %v230, 0.0
  %v263 = vmax.f32 %v235, 0.0
  %v264 = vmax.f32 %v238, 0.0
  %v265 = vpack.c.bf16 %v242, %v241
  %v266 = vpack.c.bf16 %v244, %v243
  %v267 = vpack.c.bf16 %v246, %v245
  %v268 = vpack.c.bf16 %v248, %v247
  %v269 = vpack.c.bf16 %v250, %v249
  %v270 = vpack.c.bf16 %v252, %v251
  %v271 = vpack.c.bf16 %v254, %v253
  %v272 = vpack.c.bf16 %v256, %v255
  %v273 = vpack.c.bf16 %v258, %v257
  %v274 = vpack.c.bf16 %v260, %v259
  %v275 = vpack.c.bf16 %v262, %v261
  %v276 = vpack.c.bf16 %v264, %v263
  %v277 = vld [vmem:[%s3] sm:$0xf]
  %v278 = vld [vmem:[%s3 + $0x4] sm:$0xf]
  %v279 = vld [vmem:[%s3 + $0x8] sm:$0xf]
  %v280 = vld [vmem:[%s3 + $0xc] sm:$0xf]
  %v281 = vld [vmem:[%s4] sm:$0x1]
  %v283 = vlaneseq
  %v284 = vshrl.u32 %v283, 7
  %v285 = vsub.s32 0, %v284
  %v286 = vrot.slane %v281, %v285
  %v292 = vunpack.c.l.b16 %v277
  %v293 = vunpack.c.l.b16 %v278
  %v294 = vunpack.c.l.b16 %v279
  %v295 = vunpack.c.l.b16 %v280
  %v296 = vpack.c.b16 %v293, %v292
  %v297 = vpack.c.b16 %v295, %v294
  %vm300 = vcmask 261120
  %v302 = vsel %vm300, %v265, 0
  %v305 = vsel %vm300, %v266, 0
  %v308 = vsel %vm300, %v267, 0
  %v311 = vsel %vm300, %v268, 0
  %v314 = vsel %vm300, %v269, 0
  %v317 = vsel %vm300, %v270, 0
  %v320 = vsel %vm300, %v271, 0
  %v323 = vsel %vm300, %v272, 0
  %v326 = vsel %vm300, %v273, 0
  %v329 = vsel %vm300, %v274, 0
  %v332 = vsel %vm300, %v275, 0
  %v335 = vsel %vm300, %v276, 0
  %337 = vmatprep.subr.bf16.mxu0 0
  %338 = vmatpush1.bf16.msra.mxu0 %v296
  %339 = vmatprep.subr.bf16.mxu0 0
  %340 = vmatpush1.bf16.msra.mxu0 %v297
  %341 = vmatprep.subr.bf16.mxu0 0
  %342 = vmatpush1.bf16.msra.mxu0 0
  %343 = vmatprep.subr.bf16.mxu0 0
  %344 = vmatpush1.bf16.msra.mxu0 0
  %345 = vmatprep.subr.bf16.mxu0 0
  %346 = vmatpush1.bf16.msra.mxu0 0
  %347 = vmatprep.subr.bf16.mxu0 0
  %348 = vmatpush1.bf16.msra.mxu0 0
  %349 = vmatprep.subr.bf16.mxu0 0
  %350 = vmatpush1.bf16.msra.mxu0 0
  %351 = vmatprep.subr.bf16.mxu0 0
  %352 = vmatpush1.bf16.msra.mxu0 0
  %353 = vmatprep.subr.bf16.mxu0 0
  %354 = vmatpush1.bf16.msra.mxu0 0
  %355 = vmatprep.subr.bf16.mxu0 0
  %356 = vmatpush1.bf16.msra.mxu0 0
  %357 = vmatprep.subr.bf16.mxu0 0
  %358 = vmatpush1.bf16.msra.mxu0 0
  %359 = vmatprep.subr.bf16.mxu0 0
  %360 = vmatpush1.bf16.msra.mxu0 0
  %361 = vmatprep.subr.bf16.mxu0 0
  %362 = vmatpush1.bf16.msra.mxu0 0
  %363 = vmatprep.subr.bf16.mxu0 0
  %364 = vmatpush1.bf16.msra.mxu0 0
  %365 = vmatprep.subr.bf16.mxu0 0
  %366 = vmatpush1.bf16.msra.mxu0 0
  %367 = vmatprep.subr.bf16.mxu0 0
  %368 = vmatpush1.bf16.msra.mxu0 0
  %369 = vmatprep.mubr.bf16.mxu0 0
  %370 = vmatmul.mubr.bf16.gmra.mrb[0].mxu0 %v302
  %v371 = vpop.f32.mrb[0].mxu0
  %v372 = vadd.f32 %v286, %v371
  %v373 = vpop.f32.mrb[0].mxu0
  %v374 = vpop.f32.mrb[0].mxu0
  %v375 = vadd.f32 %v286, %v374
  %v376 = vpop.f32.mrb[0].mxu0
  %377 = vmatprep.mubr.bf16.mxu0 0
  %378 = vmatmul.mubr.bf16.gmra.mrb[0].mxu0 %v305
  %v379 = vpop.f32.mrb[0].mxu0
  %v380 = vadd.f32 %v286, %v379
  %v381 = vpop.f32.mrb[0].mxu0
  %v382 = vpop.f32.mrb[0].mxu0
  %v383 = vadd.f32 %v286, %v382
  %v384 = vpop.f32.mrb[0].mxu0
  %385 = vmatprep.mubr.bf16.mxu0 0
  %386 = vmatmul.mubr.bf16.gmra.mrb[0].mxu0 %v308
  %v387 = vpop.f32.mrb[0].mxu0
  %v388 = vadd.f32 %v286, %v387
  %v389 = vpop.f32.mrb[0].mxu0
  %v390 = vpop.f32.mrb[0].mxu0
  %v391 = vadd.f32 %v286, %v390
  %v392 = vpop.f32.mrb[0].mxu0
  %393 = vmatprep.mubr.bf16.mxu0 0
  %394 = vmatmul.mubr.bf16.gmra.mrb[0].mxu0 %v311
  %v395 = vpop.f32.mrb[0].mxu0
  %v396 = vadd.f32 %v286, %v395
  %v397 = vpop.f32.mrb[0].mxu0
  %v398 = vpop.f32.mrb[0].mxu0
  %v399 = vadd.f32 %v286, %v398
  %v400 = vpop.f32.mrb[0].mxu0
  %401 = vmatprep.mubr.bf16.mxu0 0
  %402 = vmatmul.mubr.bf16.gmra.mrb[0].mxu0 %v314
  %v403 = vpop.f32.mrb[0].mxu0
  %v404 = vadd.f32 %v286, %v403
  %v405 = vpop.f32.mrb[0].mxu0
  %v406 = vpop.f32.mrb[0].mxu0
  %v407 = vadd.f32 %v286, %v406
  %v408 = vpop.f32.mrb[0].mxu0
  %409 = vmatprep.mubr.bf16.mxu0 0
  %410 = vmatmul.mubr.bf16.gmra.mrb[0].mxu0 %v317
  %v411 = vpop.f32.mrb[0].mxu0
  %v412 = vadd.f32 %v286, %v411
  %v413 = vpop.f32.mrb[0].mxu0
  %v414 = vpop.f32.mrb[0].mxu0
  %v415 = vadd.f32 %v286, %v414
  %v416 = vpop.f32.mrb[0].mxu0
  %417 = vmatprep.mubr.bf16.mxu0 0
  %418 = vmatmul.mubr.bf16.gmra.mrb[0].mxu0 %v320
  %v419 = vpop.f32.mrb[0].mxu0
  %v420 = vadd.f32 %v286, %v419
  %v421 = vpop.f32.mrb[0].mxu0
  %v422 = vpop.f32.mrb[0].mxu0
  %v423 = vadd.f32 %v286, %v422
  %v424 = vpop.f32.mrb[0].mxu0
  %425 = vmatprep.mubr.bf16.mxu0 0
  %426 = vmatmul.mubr.bf16.gmra.mrb[0].mxu0 %v323
  %v427 = vpop.f32.mrb[0].mxu0
  %v428 = vadd.f32 %v286, %v427
  %v429 = vpop.f32.mrb[0].mxu0
  %v430 = vpop.f32.mrb[0].mxu0
  %v431 = vadd.f32 %v286, %v430
  %v432 = vpop.f32.mrb[0].mxu0
  %433 = vmatprep.mubr.bf16.mxu0 0
  %434 = vmatmul.mubr.bf16.gmra.mrb[0].mxu0 %v326
  %v435 = vpop.f32.mrb[0].mxu0
  %v436 = vadd.f32 %v286, %v435
  %v437 = vpop.f32.mrb[0].mxu0
  %v438 = vpop.f32.mrb[0].mxu0
  %v439 = vadd.f32 %v286, %v438
  %v440 = vpop.f32.mrb[0].mxu0
  %441 = vmatprep.mubr.bf16.mxu0 0
  %442 = vmatmul.mubr.bf16.gmra.mrb[0].mxu0 %v329
  %v443 = vpop.f32.mrb[0].mxu0
  %v444 = vadd.f32 %v286, %v443
  %v445 = vpop.f32.mrb[0].mxu0
  %v446 = vpop.f32.mrb[0].mxu0
  %v447 = vadd.f32 %v286, %v446
  %v448 = vpop.f32.mrb[0].mxu0
  %449 = vmatprep.mubr.bf16.mxu0 0
  %450 = vmatmul.mubr.bf16.gmra.mrb[0].mxu0 %v332
  %v451 = vpop.f32.mrb[0].mxu0
  %v452 = vadd.f32 %v286, %v451
  %v453 = vpop.f32.mrb[0].mxu0
  %v454 = vpop.f32.mrb[0].mxu0
  %v455 = vadd.f32 %v286, %v454
  %v456 = vpop.f32.mrb[0].mxu0
  %457 = vmatprep.mubr.bf16.mxu0 0
  %458 = vmatmul.mubr.bf16.gmra.mrb[0].mxu0 %v335
  %v459 = vpop.f32.mrb[0].mxu0
  %v460 = vadd.f32 %v286, %v459
  %v461 = vpop.f32.mrb[0].mxu0
  %v462 = vpop.f32.mrb[0].mxu0
  %v463 = vadd.f32 %v286, %v462
  %v464 = vpop.f32.mrb[0].mxu0
  %465 = vdwg.mxu0
  %v466 = vmax.f32 %v372, 0.0
  %v467 = vmax.f32 %v375, 0.0
  %v468 = vmax.f32 %v380, 0.0
  %v469 = vmax.f32 %v383, 0.0
  %v470 = vmax.f32 %v388, 0.0
  %v471 = vmax.f32 %v391, 0.0
  %v472 = vmax.f32 %v396, 0.0
  %v473 = vmax.f32 %v399, 0.0
  %v474 = vmax.f32 %v404, 0.0
  %v475 = vmax.f32 %v407, 0.0
  %v476 = vmax.f32 %v412, 0.0
  %v477 = vmax.f32 %v415, 0.0
  %v478 = vmax.f32 %v420, 0.0
  %v479 = vmax.f32 %v423, 0.0
  %v480 = vmax.f32 %v428, 0.0
  %v481 = vmax.f32 %v431, 0.0
  %v482 = vmax.f32 %v436, 0.0
  %v483 = vmax.f32 %v439, 0.0
  %v484 = vmax.f32 %v444, 0.0
  %v485 = vmax.f32 %v447, 0.0
  %v486 = vmax.f32 %v452, 0.0
  %v487 = vmax.f32 %v455, 0.0
  %v488 = vmax.f32 %v460, 0.0
  %v489 = vmax.f32 %v463, 0.0
  %v490 = vpack.c.bf16 %v467, %v466
  %v491 = vpack.c.bf16 %v469, %v468
  %v492 = vpack.c.bf16 %v471, %v470
  %v493 = vpack.c.bf16 %v473, %v472
  %v494 = vpack.c.bf16 %v475, %v474
  %v495 = vpack.c.bf16 %v477, %v476
  %v496 = vpack.c.bf16 %v479, %v478
  %v497 = vpack.c.bf16 %v481, %v480
  %v498 = vpack.c.bf16 %v483, %v482
  %v499 = vpack.c.bf16 %v485, %v484
  %v500 = vpack.c.bf16 %v487, %v486
  %v501 = vpack.c.bf16 %v489, %v488
  %v502 = vld [vmem:[%s5] sm:$0xf]
  %v503 = vld [vmem:[%s5 + $0x4] sm:$0xf]
  %v504 = vld [vmem:[%s5 + $0x8] sm:$0xf]
  %v505 = vld [vmem:[%s5 + $0xc] sm:$0xf]
  %v506 = vld [vmem:[%s6] sm:$0x1]
  %v508 = vlaneseq
  %v509 = vshrl.u32 %v508, 7
  %v510 = vsub.s32 0, %v509
  %v511 = vrot.slane %v506, %v510
  %v517 = vunpack.c.l.b16 %v502
  %v518 = vunpack.c.l.b16 %v503
  %v519 = vunpack.c.l.b16 %v504
  %v520 = vunpack.c.l.b16 %v505
  %v521 = vpack.c.b16 %v518, %v517
  %v522 = vpack.c.b16 %v520, %v519
  %v526 = vsel %vm300, %v490, 0
  %v529 = vsel %vm300, %v491, 0
  %v532 = vsel %vm300, %v492, 0
  %v535 = vsel %vm300, %v493, 0
  %v538 = vsel %vm300, %v494, 0
  %v541 = vsel %vm300, %v495, 0
  %v544 = vsel %vm300, %v496, 0
  %v547 = vsel %vm300, %v497, 0
  %v550 = vsel %vm300, %v498, 0
  %v553 = vsel %vm300, %v499, 0
  %v556 = vsel %vm300, %v500, 0
  %v559 = vsel %vm300, %v501, 0
  %561 = vmatprep.subr.bf16.mxu0 0
  %562 = vmatpush1.bf16.msra.mxu0 %v521
  %563 = vmatprep.subr.bf16.mxu0 0
  %564 = vmatpush1.bf16.msra.mxu0 %v522
  %565 = vmatprep.subr.bf16.mxu0 0
  %566 = vmatpush1.bf16.msra.mxu0 0
  %567 = vmatprep.subr.bf16.mxu0 0
  %568 = vmatpush1.bf16.msra.mxu0 0
  %569 = vmatprep.subr.bf16.mxu0 0
  %570 = vmatpush1.bf16.msra.mxu0 0
  %571 = vmatprep.subr.bf16.mxu0 0
  %572 = vmatpush1.bf16.msra.mxu0 0
  %573 = vmatprep.subr.bf16.mxu0 0
  %574 = vmatpush1.bf16.msra.mxu0 0
  %575 = vmatprep.subr.bf16.mxu0 0
  %576 = vmatpush1.bf16.msra.mxu0 0
  %577 = vmatprep.subr.bf16.mxu0 0
  %578 = vmatpush1.bf16.msra.mxu0 0
  %579 = vmatprep.subr.bf16.mxu0 0
  %580 = vmatpush1.bf16.msra.mxu0 0
  %581 = vmatprep.subr.bf16.mxu0 0
  %582 = vmatpush1.bf16.msra.mxu0 0
  %583 = vmatprep.subr.bf16.mxu0 0
  %584 = vmatpush1.bf16.msra.mxu0 0
  %585 = vmatprep.subr.bf16.mxu0 0
  %586 = vmatpush1.bf16.msra.mxu0 0
  %587 = vmatprep.subr.bf16.mxu0 0
  %588 = vmatpush1.bf16.msra.mxu0 0
  %589 = vmatprep.subr.bf16.mxu0 0
  %590 = vmatpush1.bf16.msra.mxu0 0
  %591 = vmatprep.subr.bf16.mxu0 0
  %592 = vmatpush1.bf16.msra.mxu0 0
  %593 = vmatprep.mubr.bf16.mxu0 0
  %594 = vmatmul.mubr.bf16.gmra.mrb[0].mxu0 %v526
  %v595 = vpop.f32.mrb[0].mxu0
  %v596 = vadd.f32 %v511, %v595
  %v597 = vpop.f32.mrb[0].mxu0
  %v598 = vpop.f32.mrb[0].mxu0
  %v599 = vadd.f32 %v511, %v598
  %v600 = vpop.f32.mrb[0].mxu0
  %601 = vmatprep.mubr.bf16.mxu0 0
  %602 = vmatmul.mubr.bf16.gmra.mrb[0].mxu0 %v529
  %v603 = vpop.f32.mrb[0].mxu0
  %v604 = vadd.f32 %v511, %v603
  %v605 = vpop.f32.mrb[0].mxu0
  %v606 = vpop.f32.mrb[0].mxu0
  %v607 = vadd.f32 %v511, %v606
  %v608 = vpop.f32.mrb[0].mxu0
  %609 = vmatprep.mubr.bf16.mxu0 0
  %610 = vmatmul.mubr.bf16.gmra.mrb[0].mxu0 %v532
  %v611 = vpop.f32.mrb[0].mxu0
  %v612 = vadd.f32 %v511, %v611
  %v613 = vpop.f32.mrb[0].mxu0
  %v614 = vpop.f32.mrb[0].mxu0
  %v615 = vadd.f32 %v511, %v614
  %v616 = vpop.f32.mrb[0].mxu0
  %617 = vmatprep.mubr.bf16.mxu0 0
  %618 = vmatmul.mubr.bf16.gmra.mrb[0].mxu0 %v535
  %v619 = vpop.f32.mrb[0].mxu0
  %v620 = vadd.f32 %v511, %v619
  %v621 = vpop.f32.mrb[0].mxu0
  %v622 = vpop.f32.mrb[0].mxu0
  %v623 = vadd.f32 %v511, %v622
  %v624 = vpop.f32.mrb[0].mxu0
  %625 = vmatprep.mubr.bf16.mxu0 0
  %626 = vmatmul.mubr.bf16.gmra.mrb[0].mxu0 %v538
  %v627 = vpop.f32.mrb[0].mxu0
  %v628 = vadd.f32 %v511, %v627
  %v629 = vpop.f32.mrb[0].mxu0
  %v630 = vpop.f32.mrb[0].mxu0
  %v631 = vadd.f32 %v511, %v630
  %v632 = vpop.f32.mrb[0].mxu0
  %633 = vmatprep.mubr.bf16.mxu0 0
  %634 = vmatmul.mubr.bf16.gmra.mrb[0].mxu0 %v541
  %v635 = vpop.f32.mrb[0].mxu0
  %v636 = vadd.f32 %v511, %v635
  %v637 = vpop.f32.mrb[0].mxu0
  %v638 = vpop.f32.mrb[0].mxu0
  %v639 = vadd.f32 %v511, %v638
  %v640 = vpop.f32.mrb[0].mxu0
  %641 = vmatprep.mubr.bf16.mxu0 0
  %642 = vmatmul.mubr.bf16.gmra.mrb[0].mxu0 %v544
  %v643 = vpop.f32.mrb[0].mxu0
  %v644 = vadd.f32 %v511, %v643
  %v645 = vpop.f32.mrb[0].mxu0
  %v646 = vpop.f32.mrb[0].mxu0
  %v647 = vadd.f32 %v511, %v646
  %v648 = vpop.f32.mrb[0].mxu0
  %649 = vmatprep.mubr.bf16.mxu0 0
  %650 = vmatmul.mubr.bf16.gmra.mrb[0].mxu0 %v547
  %v651 = vpop.f32.mrb[0].mxu0
  %v652 = vadd.f32 %v511, %v651
  %v653 = vpop.f32.mrb[0].mxu0
  %v654 = vpop.f32.mrb[0].mxu0
  %v655 = vadd.f32 %v511, %v654
  %v656 = vpop.f32.mrb[0].mxu0
  %657 = vmatprep.mubr.bf16.mxu0 0
  %658 = vmatmul.mubr.bf16.gmra.mrb[0].mxu0 %v550
  %v659 = vpop.f32.mrb[0].mxu0
  %v660 = vadd.f32 %v511, %v659
  %v661 = vpop.f32.mrb[0].mxu0
  %v662 = vpop.f32.mrb[0].mxu0
  %v663 = vadd.f32 %v511, %v662
  %v664 = vpop.f32.mrb[0].mxu0
  %665 = vmatprep.mubr.bf16.mxu0 0
  %666 = vmatmul.mubr.bf16.gmra.mrb[0].mxu0 %v553
  %v667 = vpop.f32.mrb[0].mxu0
  %v668 = vadd.f32 %v511, %v667
  %v669 = vpop.f32.mrb[0].mxu0
  %v670 = vpop.f32.mrb[0].mxu0
  %v671 = vadd.f32 %v511, %v670
  %v672 = vpop.f32.mrb[0].mxu0
  %673 = vmatprep.mubr.bf16.mxu0 0
  %674 = vmatmul.mubr.bf16.gmra.mrb[0].mxu0 %v556
  %v675 = vpop.f32.mrb[0].mxu0
  %v676 = vadd.f32 %v511, %v675
  %v677 = vpop.f32.mrb[0].mxu0
  %v678 = vpop.f32.mrb[0].mxu0
  %v679 = vadd.f32 %v511, %v678
  %v680 = vpop.f32.mrb[0].mxu0
  %681 = vmatprep.mubr.bf16.mxu0 0
  %682 = vmatmul.mubr.bf16.gmra.mrb[0].mxu0 %v559
  %v683 = vpop.f32.mrb[0].mxu0
  %v684 = vadd.f32 %v511, %v683
  %v685 = vpop.f32.mrb[0].mxu0
  %v686 = vpop.f32.mrb[0].mxu0
  %v687 = vadd.f32 %v511, %v686
  %v688 = vpop.f32.mrb[0].mxu0
  %689 = vdwg.mxu0
  %vm690 = vcmask 31744
  %691 = vst.msk [vmem:[%s7] sm:$0xff] %vm690, %v596
  %692 = vst.msk [vmem:[%s7 + $0x8] sm:$0xff] %vm690, %v599
  %693 = vst.msk [vmem:[%s7 + $0x10] sm:$0xff] %vm690, %v604
  %694 = vst.msk [vmem:[%s7 + $0x18] sm:$0xff] %vm690, %v607
  %695 = vst.msk [vmem:[%s7 + $0x20] sm:$0xff] %vm690, %v612
  %696 = vst.msk [vmem:[%s7 + $0x28] sm:$0xff] %vm690, %v615
  %697 = vst.msk [vmem:[%s7 + $0x30] sm:$0xff] %vm690, %v620
  %698 = vst.msk [vmem:[%s7 + $0x38] sm:$0xff] %vm690, %v623
  %699 = vst.msk [vmem:[%s7 + $0x40] sm:$0xff] %vm690, %v628
  %700 = vst.msk [vmem:[%s7 + $0x48] sm:$0xff] %vm690, %v631
  %701 = vst.msk [vmem:[%s7 + $0x50] sm:$0xff] %vm690, %v636
  %702 = vst.msk [vmem:[%s7 + $0x58] sm:$0xff] %vm690, %v639
  %703 = vst.msk [vmem:[%s7 + $0x60] sm:$0xff] %vm690, %v644
  %704 = vst.msk [vmem:[%s7 + $0x68] sm:$0xff] %vm690, %v647
  %705 = vst.msk [vmem:[%s7 + $0x70] sm:$0xff] %vm690, %v652
  %706 = vst.msk [vmem:[%s7 + $0x78] sm:$0xff] %vm690, %v655
  %707 = vst.msk [vmem:[%s7 + $0x80] sm:$0xff] %vm690, %v660
  %708 = vst.msk [vmem:[%s7 + $0x88] sm:$0xff] %vm690, %v663
  %709 = vst.msk [vmem:[%s7 + $0x90] sm:$0xff] %vm690, %v668
  %710 = vst.msk [vmem:[%s7 + $0x98] sm:$0xff] %vm690, %v671
  %711 = vst.msk [vmem:[%s7 + $0xa0] sm:$0xff] %vm690, %v676
  %712 = vst.msk [vmem:[%s7 + $0xa8] sm:$0xff] %vm690, %v679
  %713 = vst.msk [vmem:[%s7 + $0xb0] sm:$0xff] %vm690, %v684
  %714 = vst.msk [vmem:[%s7 + $0xb8] sm:$0xff] %vm690, %v687
  // Predicated region
  $region30: #{fused_node_mlp.1} parent=0 // pred_check
    _
  $region31: #{fused_node_mlp.1} parent=0 // pred_check_branch
    %716 = sbr.rel (0) target = $region33
  $region32: #{fused_node_mlp.1} parent=0 // pred_region
    _
  $region33: #{fused_node_mlp.1} parent=0 // pred_fallthru
    _
  // Predicated region
  $region34: #{fused_node_mlp.1} parent=0 // pred_check
    _
  $region35: #{fused_node_mlp.1} parent=0 // pred_check_branch
    %718 = sbr.rel (0) target = $region37
  $region36: #{fused_node_mlp.1} parent=0 // pred_region
    _
  $region37: #{fused_node_mlp.1} parent=0 // pred_fallthru
    _

</llo_original>
